<compile_context>
chip_gen: v5e
topology: v5e:2x2
jax: 0.10.0
libtpu: 0.0.40
codegen_flags: <defaults>
</compile_context>

<pallas_src>
import functools

import jax
import jax.numpy as jnp
from jax.experimental import pallas as pl
from jax.experimental.pallas import tpu as pltpu

_VMEM_LIMIT = 48 * 1024 * 1024      # explicit scoped-VMEM request (< 64 MiB v7x physical)
_VMEM_BLOCK_BUDGET = 24 * 1024 * 1024  # per-step block budget used for bb selection


# --------------------------------------------------------------------------- #
# Fused single-pass kernel: 1 HBM read + 1 HBM write of the activation slab.
# --------------------------------------------------------------------------- #
def _fused_kernel(x_ref, wkv_ref, bv_ref, wr_ref, br_ref, out_ref):
    """
    x_ref   : (bb, c, hw)   I/O dtype (f32 or bf16); channels on sublanes, space on lanes
    wkv_ref : (2*kcp, c)    rows [0:kcp] padded key weights, [kcp:2kcp] padded value weights
    bv_ref  : (kcp, 1)      padded value bias (applied post-reduction; key bias dropped)
    wr_ref  : (c, kcp)      padded reprojection weight (zero cols for pad channels)
    br_ref  : (c, 1)        reprojection bias
    out_ref : (bb, c, hw)
    """
    kcp = wkv_ref.shape[0] // 2
    x = x_ref[...].astype(jnp.float32)                               # (bb, c, hw)
    bb = x.shape[0]

    # Single batched key/value projection on the MXU (lane-dense N = hw).
    wkv = jnp.broadcast_to(wkv_ref[...], (bb,) + wkv_ref.shape)      # (bb, 2kcp, c)
    kv = jnp.einsum('boc,bch->boh', wkv, x,
                    preferred_element_type=jnp.float32)              # (bb, 2kcp, hw)
    k = kv[:, :kcp, :]                                               # sublane-aligned slices
    v = kv[:, kcp:, :]

    # Per-head spatial softmax kept unnormalized (normalize via den).
    k_max = jnp.max(k, axis=-1, keepdims=True)                       # (bb, kcp, 1)
    p = jnp.exp(k - k_max)                                           # (bb, kcp, hw)
    den = jnp.sum(p, axis=-1, keepdims=True)                         # (bb, kcp, 1)
    num = jnp.sum(p * v, axis=-1, keepdims=True)                     # (bb, kcp, 1)
    ctx = num * pl.reciprocal(den, approx=False) + bv_ref[...][None]  # (bb, kcp, 1)

    # Batched reprojection (no per-batch Python unroll).
    wr = jnp.broadcast_to(wr_ref[...], (bb,) + wr_ref.shape)         # (bb, c, kcp)
    delta = jnp.einsum('bck,bkx->bcx', wr, ctx,
                       preferred_element_type=jnp.float32) + br_ref[...][None]  # (bb, c, 1)

    out_ref[...] = (x + delta).astype(out_ref.dtype)                 # lane-dense store


# --------------------------------------------------------------------------- #
# Split path for large h*w: online-softmax context kernel + residual-add kernel.
# --------------------------------------------------------------------------- #
def _context_kernel(x_ref, wkv_ref, o_ref, m_sc, num_sc, den_sc, *, hw_actual, thw):
    t = pl.program_id(1)

    @pl.when(t == 0)
    def _():
        m_sc[...] = jnp.full_like(m_sc, -jnp.inf)
        num_sc[...] = jnp.zeros_like(num_sc)
        den_sc[...] = jnp.zeros_like(den_sc)

    kcp = wkv_ref.shape[0] // 2
    x = x_ref[...].astype(jnp.float32)                               # (bb, c, thw)
    bb = x.shape[0]
    wkv = jnp.broadcast_to(wkv_ref[...], (bb,) + wkv_ref.shape)
    kv = jnp.einsum('boc,bch->boh', wkv, x, preferred_element_type=jnp.float32)
    k = kv[:, :kcp, :]
    v = kv[:, kcp:, :]

    if hw_actual % thw != 0:  # static check: mask zero-padded tail positions
        pos = t * thw + jax.lax.broadcasted_iota(jnp.int32, k.shape, 2)
        k = jnp.where(pos < hw_actual, k, -jnp.inf)

    m_prev = m_sc[...]
    m_new = jnp.maximum(m_prev, jnp.max(k, axis=-1, keepdims=True))
    alpha = jnp.exp(m_prev - m_new)
    p = jnp.exp(k - m_new)
    den_sc[...] = alpha * den_sc[...] + jnp.sum(p, axis=-1, keepdims=True)
    num_sc[...] = alpha * num_sc[...] + jnp.sum(p * v, axis=-1, keepdims=True)
    m_sc[...] = m_new

    @pl.when(t == pl.num_programs(1) - 1)
    def _():
        o_ref[...] = num_sc[...] * pl.reciprocal(den_sc[...], approx=False)


def _residual_kernel(x_ref, delta_ref, out_ref):
    out_ref[...] = (x_ref[...].astype(jnp.float32) + delta_ref[...]).astype(out_ref.dtype)


# --------------------------------------------------------------------------- #
# Wrapper helpers
# --------------------------------------------------------------------------- #
def _prep_weights(params, nin):
    wk, bk, wq, bq, wv, bv, wr, br = params
    del wq, bq  # query path is mathematically dead (softmax over singleton channel dim)
    kc, vc = wk.shape[0], wv.shape[0]
    # Dead-query / per-head-scalar simplification only holds for the module's config.
    assert kc == vc, "ScaleMixingModule kernel assumes key_channels == value_channels == head_count"
    assert wr.shape == (nin, vc)
    kcp = ((kc + 7) // 8) * 8          # sublane-tile aligned head count
    f32 = jnp.float32
    wk_pad = jnp.zeros((kcp, nin), f32).at[:kc].set(wk.astype(f32))
    wv_pad = jnp.zeros((kcp, nin), f32).at[:vc].set(wv.astype(f32))
    wkv = jnp.concatenate([wk_pad, wv_pad], axis=0)                      # key bias dropped
    bv_pad = jnp.zeros((kcp, 1), f32).at[:vc, 0].set(bv.astype(f32))     # applied post-reduction
    wr_pad = jnp.zeros((nin, kcp), f32).at[:, :vc].set(wr.astype(f32))
    br_col = br.astype(f32).reshape(nin, 1)
    return wkv, bv_pad, wr_pad, br_col, kc, vc, kcp


def _pick_batch_block(n, per_batch_bytes, *, target_steps, vmem_budget):
    """Largest divisor of n giving >= target_steps grid steps and fitting the VMEM budget."""
    cap = max(1, n // max(1, target_steps))
    cap = min(cap, max(1, vmem_budget // max(1, per_batch_bytes)))
    bb = max(1, min(n, cap))
    while n % bb:
        bb -= 1
    return bb


def _full_spec(shape):
    return pl.BlockSpec(shape, lambda *_: (0,) * len(shape))


def scale_mixing_forward(x_nchw, params, *, hw_block=4096, force_split=False,
                         vmem_budget_bytes=_VMEM_BLOCK_BUDGET, target_steps=8):
    """x_nchw: (n, nin, h, w).  Returns (n, nin, h, w) in the SAME dtype as the input."""
    n, c, h, w = x_nchw.shape
    hw = h * w
    x = x_nchw.reshape(n, c, hw)                    # no dtype upcast: keep HBM bytes minimal
    wkv, bv_pad, wr_pad, br_col, kc, vc, kcp = _prep_weights(params, c)
    itemsize = jnp.dtype(x.dtype).itemsize

    # Rough per-batch VMEM bytes for the fused path: double-buffered in+out blocks
    # plus the f32 working set (x_f32, kv, p, p*v).
    per_batch_fused = 2 * 2 * c * hw * itemsize + (c + 6 * kcp) * hw * 4
    use_split = force_split or per_batch_fused > vmem_budget_bytes

    if not use_split:
        bb = _pick_batch_block(n, per_batch_fused, target_steps=target_steps,
                               vmem_budget=vmem_budget_bytes)
        out = pl.pallas_call(
            _fused_kernel,
            out_shape=jax.ShapeDtypeStruct((n, c, hw), x.dtype),
            grid_spec=pltpu.PrefetchScalarGridSpec(
                num_scalar_prefetch=0,
                grid=(n // bb,),
                in_specs=[
                    pl.BlockSpec((bb, c, hw), lambda g: (g, 0, 0)),       # x
                    _full_spec((2 * kcp, c)),                             # fused k/v weight
                    _full_spec((kcp, 1)),                                 # value bias
                    _full_spec((c, kcp)),                                 # reprojection weight
                    _full_spec((c, 1)),                                   # reprojection bias
                ],
                out_specs=pl.BlockSpec((bb, c, hw), lambda g: (g, 0, 0)),
            ),
            compiler_params=pltpu.CompilerParams(
                dimension_semantics=("parallel",),
                vmem_limit_bytes=_VMEM_LIMIT),
        )(x, wkv, bv_pad, wr_pad, br_col)
        return out.reshape(n, c, h, w)

    # ---- split path (large h*w / v7x 64 MiB VMEM): hw-tiled online softmax ---- #
    thw = max(128, min(int(hw_block) // 128 * 128, ((hw + 127) // 128) * 128))
    hw_pad = pl.cdiv(hw, thw) * thw
    x_p = x if hw_pad == hw else jnp.pad(x, ((0, 0), (0, 0), (0, hw_pad - hw)))

    per_batch_split = 2 * 2 * c * thw * itemsize + (c + 6 * kcp) * thw * 4
    bb = _pick_batch_block(n, per_batch_split, target_steps=2,
                           vmem_budget=vmem_budget_bytes)

    ctx = pl.pallas_call(
        functools.partial(_context_kernel, hw_actual=hw, thw=thw),
        out_shape=jax.ShapeDtypeStruct((n, kcp, 1), jnp.float32),
        grid_spec=pltpu.PrefetchScalarGridSpec(
            num_scalar_prefetch=0,
            grid=(n // bb, hw_pad // thw),
            in_specs=[
                pl.BlockSpec((bb, c, thw), lambda g, t: (g, 0, t)),
                pl.BlockSpec((2 * kcp, c), lambda g, t: (0, 0)),
            ],
            out_specs=pl.BlockSpec((bb, kcp, 1), lambda g, t: (g, 0, 0)),
            scratch_shapes=[pltpu.VMEM((bb, kcp, 1), jnp.float32)] * 3,  # m, num, den
        ),
        compiler_params=pltpu.CompilerParams(
            dimension_semantics=("parallel", "arbitrary"),
            vmem_limit_bytes=_VMEM_LIMIT),
    )(x_p, wkv)                                                       # (n, kcp, 1) f32

    # Tiny reprojection on (n, vc) contexts (negligible vs the HBM-bound slabs).
    _, _, _, _, _, bv, wr, br = params
    ctx2 = ctx[:, :vc, 0] + bv.astype(jnp.float32)[None, :]           # (n, vc)
    delta = ctx2 @ wr.astype(jnp.float32).T + br.astype(jnp.float32)[None, :]  # (n, c)
    delta3 = delta[:, :, None]                                        # (n, c, 1)

    out_p = pl.pallas_call(
        _residual_kernel,
        out_shape=jax.ShapeDtypeStruct((n, c, hw_pad), x.dtype),
        grid_spec=pltpu.PrefetchScalarGridSpec(
            num_scalar_prefetch=0,
            grid=(n // bb, hw_pad // thw),
            in_specs=[
                pl.BlockSpec((bb, c, thw), lambda g, t: (g, 0, t)),
                pl.BlockSpec((bb, c, 1), lambda g, t: (g, 0, 0)),
            ],
            out_specs=pl.BlockSpec((bb, c, thw), lambda g, t: (g, 0, t)),
        ),
        compiler_params=pltpu.CompilerParams(
            dimension_semantics=("parallel", "parallel"),
            vmem_limit_bytes=_VMEM_LIMIT),
    )(x_p, delta3)

    out = out_p if hw_pad == hw else out_p[:, :, :hw]
    return out.reshape(n, c, h, w)


# --------------------------------------------------------------------------- #
# Pure-JAX mirror of the PyTorch forward (validation) + param init
# --------------------------------------------------------------------------- #
def reference_forward(x_nchw, params):
    wk, bk, wq, bq, wv, bv, wr, br = params
    n, c, h, w = x_nchw.shape
    hw = h * w
    kc = wk.shape[0]

    xf = x_nchw.reshape(n, c, hw).astype(jnp.float32)
    keys = jnp.einsum('kc,nch->nkh', wk, xf) + bk[None, :, None]
    queries = jnp.einsum('kc,nch->nkh', wq, xf) + bq[None, :, None]
    values = jnp.einsum('vc,nch->nvh', wv, xf) + bv[None, :, None]

    heads = []
    for i in range(kc):  # head_count == kc, one key/value channel per head
        key = jax.nn.softmax(keys[:, i:i + 1, :], axis=2)
        query = jax.nn.softmax(queries[:, i:i + 1, :], axis=1)        # singleton dim -> ones
        value = values[:, i:i + 1, :]
        context = jnp.einsum('nkh,nvh->nkv', key, value)
        attended = jnp.einsum('nkv,nkh->nvh', context, query)
        heads.append(attended)
    agg = jnp.concatenate(heads, axis=1)
    reproj = jnp.einsum('cv,nvh->nch', wr, agg) + br[None, :, None]
    return (reproj + xf).reshape(n, c, h, w)


def init_params(key, nin, first_mix=False):
    kc = 2 if first_mix else (nin + 1) // 4
    vc = kc
    ks = jax.random.split(key, 8)
    mk = lambda k, shape: (0.1 * jax.random.normal(k, shape)).astype(jnp.float32)
    wk = mk(ks[0], (kc, nin)); bk = mk(ks[1], (kc,))      # Conv2d (out, in) layout
    wq = mk(ks[2], (kc, nin)); bq = mk(ks[3], (kc,))
    wv = mk(ks[4], (vc, nin)); bv = mk(ks[5], (vc,))
    wr = mk(ks[6], (nin, vc)); br = mk(ks[7], (nin,))
    return (wk, bk, wq, bq, wv, bv, wr, br)


if __name__ == "__main__":
    key = jax.random.PRNGKey(0)
    k_x1, k_x2, k_x3, k_p = jax.random.split(key, 4)

    nin, h, w = 8, 16, 16            # kc = vc = head_count = (8+1)//4 = 2, hw = 256
    params = init_params(k_p, nin, first_mix=False)

    # Case 1: fused single-pass path, f32 I/O.
    x1 = jax.random.normal(k_x1, (2, nin, h, w), dtype=jnp.float32)
    out1 = jax.block_until_ready(scale_mixing_forward(x1, params))
    ref1 = reference_forward(x1, params)
    assert out1.shape == x1.shape and out1.dtype == x1.dtype
    assert jnp.allclose(out1, ref1, atol=2e-3, rtol=2e-3), "mismatch vs. reference (f32 fused)"

    # Case 2: fused path, bf16 I/O pass-through (halves HBM bytes; compute stays f32).
    x2 = jax.random.normal(k_x2, (4, nin, h, w), dtype=jnp.float32).astype(jnp.bfloat16)
    out2 = jax.block_until_ready(scale_mixing_forward(x2, params))
    ref2 = reference_forward(x2.astype(jnp.float32), params)
    assert out2.dtype == jnp.bfloat16
    assert jnp.allclose(out2.astype(jnp.float32), ref2, atol=5e-2, rtol=5e-2), \
        "mismatch vs. reference (bf16 fused)"

    # Case 3: hw-tiled online-softmax split path (forced; thw=128 -> 2 hw tiles).
    x3 = jax.random.normal(k_x3, (4, nin, h, w), dtype=jnp.float32)
    out3 = jax.block_until_ready(
        scale_mixing_forward(x3, params, force_split=True, hw_block=128))
    ref3 = reference_forward(x3, params)
    assert jnp.allclose(out3, ref3, atol=2e-3, rtol=2e-3), "mismatch vs. reference (split)"

    print("KERNEL_OK")
</pallas_src>

<mosaic_0001>
module attributes {stable_mosaic.version = 11 : i64} {
  func.func @_fused_kernel(%arg0: i32, %arg1: memref<1x8x256xf32, #tpu.memory_space<vmem>>, %arg2: memref<16x8xf32, #tpu.memory_space<vmem>>, %arg3: memref<8x1xf32, #tpu.memory_space<vmem>>, %arg4: memref<8x8xf32, #tpu.memory_space<vmem>>, %arg5: memref<8x1xf32, #tpu.memory_space<vmem>>, %arg6: memref<1x8x256xf32, #tpu.memory_space<vmem>>) attributes {dimension_semantics = [#tpu.dimension_semantics<parallel>], iteration_bounds = array<i64: 2>, scalar_prefetch = 0 : i64, scratch_operands = 0 : i64, tpu.core_type = #tpu.core_type<tc>, window_params = [{transform_indices = @transform_0, window_bounds = array<i64: 1, 8, 256>}, {pipeline_mode = #tpu.pipeline_mode<synchronous>, transform_indices = @transform_1, window_bounds = array<i64: 16, 8>}, {pipeline_mode = #tpu.pipeline_mode<synchronous>, transform_indices = @transform_2, window_bounds = array<i64: 8, 1>}, {pipeline_mode = #tpu.pipeline_mode<synchronous>, transform_indices = @transform_3, window_bounds = array<i64: 8, 8>}, {pipeline_mode = #tpu.pipeline_mode<synchronous>, transform_indices = @transform_4, window_bounds = array<i64: 8, 1>}, {transform_indices = @transform_5, window_bounds = array<i64: 1, 8, 256>}]} {
    %c0 = arith.constant 0 : index
    %c0_0 = arith.constant 0 : index
    %c0_1 = arith.constant 0 : index
    %0 = vector.load %arg1[%c0, %c0_0, %c0_1] : memref<1x8x256xf32, #tpu.memory_space<vmem>>, vector<1x8x256xf32>
    %c0_2 = arith.constant 0 : index
    %c0_3 = arith.constant 0 : index
    %1 = vector.load %arg2[%c0_2, %c0_3] : memref<16x8xf32, #tpu.memory_space<vmem>>, vector<16x8xf32>
    %2 = vector.shape_cast %1 : vector<16x8xf32> to vector<1x16x8xf32>
    "tpu.trace_start"() <{level = 10 : i32, message = "boc,bch->boh"}> : () -> ()
    %cst = arith.constant dense<0.000000e+00> : vector<1x16x256xf32>
    %3 = tpu.matmul %2, %0, %cst {dimension_numbers = #tpu.dot_dimension_numbers<[2], [1], [1], [2], [0, 0, 0, 1, 1, 2], [0], [0]>} : vector<1x16x8xf32>, vector<1x8x256xf32>, vector<1x16x256xf32> -> vector<1x16x256xf32>
    "tpu.trace_stop"() : () -> ()
    %4 = vector.extract_strided_slice %3 {offsets = [0, 0, 0], sizes = [1, 8, 256], strides = [1, 1, 1]} : vector<1x16x256xf32> to vector<1x8x256xf32>
    %5 = vector.extract_strided_slice %3 {offsets = [0, 8, 0], sizes = [1, 8, 256], strides = [1, 1, 1]} : vector<1x16x256xf32> to vector<1x8x256xf32>
    %cst_4 = arith.constant dense<0xFF800000> : vector<1x8xf32>
    %6 = vector.multi_reduction <maximumf>, %4, %cst_4 [2] : vector<1x8x256xf32> to vector<1x8xf32>
    %7 = vector.shape_cast %6 : vector<1x8xf32> to vector<1x8x1xf32>
    %8 = vector.broadcast %7 : vector<1x8x1xf32> to vector<1x8x256xf32>
    %9 = arith.subf %4, %8 : vector<1x8x256xf32>
    %10 = math.exp %9 : vector<1x8x256xf32>
    %cst_5 = arith.constant dense<0.000000e+00> : vector<1x8xf32>
    %11 = vector.multi_reduction <add>, %10, %cst_5 [2] : vector<1x8x256xf32> to vector<1x8xf32>
    %12 = vector.shape_cast %11 : vector<1x8xf32> to vector<1x8x1xf32>
    %13 = arith.mulf %10, %5 : vector<1x8x256xf32>
    %cst_6 = arith.constant dense<0.000000e+00> : vector<1x8xf32>
    %14 = vector.multi_reduction <add>, %13, %cst_6 [2] : vector<1x8x256xf32> to vector<1x8xf32>
    %15 = vector.shape_cast %14 : vector<1x8xf32> to vector<1x8x1xf32>
    %16 = tpu.reciprocal %12 : vector<1x8x1xf32> -> vector<1x8x1xf32>
    %17 = arith.mulf %15, %16 : vector<1x8x1xf32>
    %c0_7 = arith.constant 0 : index
    %c0_8 = arith.constant 0 : index
    %18 = vector.load %arg3[%c0_7, %c0_8] : memref<8x1xf32, #tpu.memory_space<vmem>>, vector<8x1xf32>
    %19 = vector.shape_cast %18 : vector<8x1xf32> to vector<1x8x1xf32>
    %20 = arith.addf %17, %19 : vector<1x8x1xf32>
    %c0_9 = arith.constant 0 : index
    %c0_10 = arith.constant 0 : index
    %21 = vector.load %arg4[%c0_9, %c0_10] : memref<8x8xf32, #tpu.memory_space<vmem>>, vector<8x8xf32>
    %22 = vector.shape_cast %21 : vector<8x8xf32> to vector<1x8x8xf32>
    "tpu.trace_start"() <{level = 10 : i32, message = "bck,bkx->bcx"}> : () -> ()
    %cst_11 = arith.constant dense<0.000000e+00> : vector<1x8x1xf32>
    %23 = tpu.matmul %22, %20, %cst_11 {dimension_numbers = #tpu.dot_dimension_numbers<[2], [1], [1], [2], [0, 0, 0, 1, 1, 2], [0], [0]>} : vector<1x8x8xf32>, vector<1x8x1xf32>, vector<1x8x1xf32> -> vector<1x8x1xf32>
    "tpu.trace_stop"() : () -> ()
    %c0_12 = arith.constant 0 : index
    %c0_13 = arith.constant 0 : index
    %24 = vector.load %arg5[%c0_12, %c0_13] : memref<8x1xf32, #tpu.memory_space<vmem>>, vector<8x1xf32>
    %25 = vector.shape_cast %24 : vector<8x1xf32> to vector<1x8x1xf32>
    %26 = arith.addf %23, %25 : vector<1x8x1xf32>
    %27 = vector.broadcast %26 : vector<1x8x1xf32> to vector<1x8x256xf32>
    %28 = arith.addf %0, %27 : vector<1x8x256xf32>
    %c0_14 = arith.constant 0 : index
    %c0_15 = arith.constant 0 : index
    %c0_16 = arith.constant 0 : index
    %29 = vector.load %arg6[%c0_14, %c0_15, %c0_16] : memref<1x8x256xf32, #tpu.memory_space<vmem>>, vector<1x8x256xf32>
    tpu.vector_store %arg6[%c0_14, %c0_15, %c0_16], %28 {strides = array<i32>} : memref<1x8x256xf32, #tpu.memory_space<vmem>>, vector<1x8x256xf32>,
    return
  }
  func.func @transform_0(%arg0: i32) -> (i32, i32, i32) {
    %c0_i32 = arith.constant 0 : i32
    %c0_i32_0 = arith.constant 0 : i32
    %c0_i32_1 = arith.constant 0 : i32
    return %arg0, %c0_i32, %c0_i32_0 : i32, i32, i32
  }
  func.func @transform_1(%arg0: i32) -> (i32, i32) {
    %c0_i32 = arith.constant 0 : i32
    %c0_i32_0 = arith.constant 0 : i32
    %c0_i32_1 = arith.constant 0 : i32
    return %c0_i32, %c0_i32_0 : i32, i32
  }
  func.func @transform_2(%arg0: i32) -> (i32, i32) {
    %c0_i32 = arith.constant 0 : i32
    %c0_i32_0 = arith.constant 0 : i32
    %c0_i32_1 = arith.constant 0 : i32
    return %c0_i32, %c0_i32_0 : i32, i32
  }
  func.func @transform_3(%arg0: i32) -> (i32, i32) {
    %c0_i32 = arith.constant 0 : i32
    %c0_i32_0 = arith.constant 0 : i32
    %c0_i32_1 = arith.constant 0 : i32
    return %c0_i32, %c0_i32_0 : i32, i32
  }
  func.func @transform_4(%arg0: i32) -> (i32, i32) {
    %c0_i32 = arith.constant 0 : i32
    %c0_i32_0 = arith.constant 0 : i32
    %c0_i32_1 = arith.constant 0 : i32
    return %c0_i32, %c0_i32_0 : i32, i32
  }
  func.func @transform_5(%arg0: i32) -> (i32, i32, i32) {
    %c0_i32 = arith.constant 0 : i32
    %c0_i32_0 = arith.constant 0 : i32
    %c0_i32_1 = arith.constant 0 : i32
    return %arg0, %c0_i32, %c0_i32_0 : i32, i32, i32
  }
}

</mosaic_0001>

<llo_original>
// kernel: tpu_custom_call.1
$region0: #{tpu_custom_call.1}
  #allocation0 [shape = 'u32[]', space=smem, size = 0x4, offset = 0x4, fixed_abs, tag = 'smem constant byte address 0x4 - core index']
  #allocation1 [shape = 'u32[72,128]{1,0:T(1,128)}', space=vmem, size = 0x9000, scoped, tag = 'internal scratch']
  %s0 = inlined_call_operand.vmem [shape: f32[2,8,256], index: 0, kind: input, shape index: {}]
  %s1 = inlined_call_operand.vmem [shape: f32[16,8], index: 1, kind: input, shape index: {}]
  %s2 = inlined_call_operand.vmem [shape: f32[8,1], index: 2, kind: input, shape index: {}]
  %s3 = inlined_call_operand.hbm [shape: f32[8,8], index: 3, kind: input, shape index: {}]
  %s4 = inlined_call_operand.vmem [shape: f32[8,1], index: 4, kind: input, shape index: {}]
  %s5 = inlined_call_operand.hbm [shape: f32[2,8,256], index: 5, kind: output, shape index: {}]
  %s6 = sld [smem:[#allocation0]]
  $region57: #{tpu_custom_call.1} parent=0
    _
  %s8 = ssub.s32 1, %s6
  %s9 = scalar_select 0, %s8, %s6
  $region1: #{tpu_custom_call.1} parent=0
    #allocation2 [shape = 'u8[4096]{0}', space=vmem, size = 0x1000, scoped, tag = 'input window, operand 3, single buffered']
    #allocation3 [shape = 's32[2]{0}', space=sflag, size = 0x8, scoped, tag = 'scoped memory for tpu_custom_call.1']
    #allocation4 [shape = 's32[2]{0}', space=sflag, size = 0x8, scoped, tag = 'scoped memory for tpu_custom_call.1']
    #allocation5 [shape = 'u8[16384]{0}', space=vmem, size = 0x4000, scoped, tag = 'output window, operand 0']
    %10 = vsyncpa [#allocation3], 0
    %11 = vsyncpa [#allocation4], 0
    %s12 = scalar_lea.sflag [#allocation4], 1
    %13 = vsyncpa %s12, 0
    loop: start=0, step=1, limit=4
    $region2: #{tpu_custom_call.1} parent=1 // loop_pre_header
      _
    $region3: #{tpu_custom_call.1} parent=1 // loop_header
      %s15 = sphi 0, %s19
      %p16 = scmp.ge.s32.totalorder %s15, 4
      %s25 = sphi 0, %s27
      %s28 = sphi 0, %s25
      %s29 = sphi 0, %s28
      %s45 = sphi 0, %s29
      %s49 = sphi 0, %s49
      %s51 = sphi 0, %s49
      %s52 = sphi 0, %s51
      %s66 = sphi 0, %s52
      %s70 = sphi 0, %s70
      %s72 = sphi 0, %s70
      %s73 = sphi 0, %s72
      %s87 = sphi 0, %s73
      %s91 = sphi 0, %s91
      %s93 = sphi 0, %s91
      %s94 = sphi 0, %s93
      %s108 = sphi 0, %s94
      %s112 = sphi 0, %s112
      %s114 = sphi 0, %s112
      %s115 = sphi 0, %s114
      %s129 = sphi 0, %s115
      %s135 = sphi 0, %s137
      %s138 = sphi 0, %s135
      %s139 = sphi 0, %s138
      %s155 = sphi 0, %s139
    $region4: #{tpu_custom_call.1} parent=1 // loop_header_branch
      %18 = sbr.rel (%p16) target = $region8
    $region5: #{tpu_custom_call.1} parent=1 // loop_body
      %s20 = ssub.s32 %s15, 1
      %s21 = ssub.s32 %s15, 2
      %s22 = sadd.s32 %s15, 1
      %s23 = ssub.s32 %s15, %s22
      %p24 = scmp.eq.s32.totalorder %s23, 0
      %s26 = sadd.s32 %s25, 1
      %s27 = scalar_select %p24, %s25, %s26
      %p30 = pneg %p24
      %p31 = scmp.eq.s32.totalorder %s15, 1
      %p32 = por %p30, %p31
      %p33 = scmp.ne.s32.totalorder %s25, %s28
      %p34 = scmp.eq.s32.totalorder %s15, 0
      %p35 = por %p33, %p34
      %p36 = scmp.ne.s32.totalorder %s25, %s28
      %p37 = scmp.eq.s32.totalorder %s20, 1
      %p38 = por %p36, %p37
      %p39 = scmp.ne.s32.totalorder %s28, %s29
      %p40 = scmp.eq.s32.totalorder %s20, 0
      %p41 = por %p39, %p40
      %p42 = scmp.ne.s32.totalorder %s28, %s29
      %p43 = scmp.eq.s32.totalorder %s21, 1
      %p44 = por %p42, %p43
      %p46 = scmp.ne.s32.totalorder %s29, %s45
      %p47 = scmp.eq.s32.totalorder %s21, 0
      %p48 = por %p46, %p47
      %s50 = sadd.s32 %s49, 1
      %p53 = scmp.eq.s32.totalorder %s15, 1
      %p54 = scmp.ne.s32.totalorder %s49, %s51
      %p55 = scmp.eq.s32.totalorder %s15, 0
      %p56 = por %p54, %p55
      %p57 = scmp.ne.s32.totalorder %s49, %s51
      %p58 = scmp.eq.s32.totalorder %s20, 1
      %p59 = por %p57, %p58
      %p60 = scmp.ne.s32.totalorder %s51, %s52
      %p61 = scmp.eq.s32.totalorder %s20, 0
      %p62 = por %p60, %p61
      %p63 = scmp.ne.s32.totalorder %s51, %s52
      %p64 = scmp.eq.s32.totalorder %s21, 1
      %p65 = por %p63, %p64
      %p67 = scmp.ne.s32.totalorder %s52, %s66
      %p68 = scmp.eq.s32.totalorder %s21, 0
      %p69 = por %p67, %p68
      %s71 = sadd.s32 %s70, 1
      %p74 = scmp.eq.s32.totalorder %s15, 1
      %p75 = scmp.ne.s32.totalorder %s70, %s72
      %p76 = scmp.eq.s32.totalorder %s15, 0
      %p77 = por %p75, %p76
      %p78 = scmp.ne.s32.totalorder %s70, %s72
      %p79 = scmp.eq.s32.totalorder %s20, 1
      %p80 = por %p78, %p79
      %p81 = scmp.ne.s32.totalorder %s72, %s73
      %p82 = scmp.eq.s32.totalorder %s20, 0
      %p83 = por %p81, %p82
      %p84 = scmp.ne.s32.totalorder %s72, %s73
      %p85 = scmp.eq.s32.totalorder %s21, 1
      %p86 = por %p84, %p85
      %p88 = scmp.ne.s32.totalorder %s73, %s87
      %p89 = scmp.eq.s32.totalorder %s21, 0
      %p90 = por %p88, %p89
      %s92 = sadd.s32 %s91, 1
      %p95 = scmp.eq.s32.totalorder %s15, 1
      %p96 = scmp.ne.s32.totalorder %s91, %s93
      %p97 = scmp.eq.s32.totalorder %s15, 0
      %p98 = por %p96, %p97
      %p99 = scmp.ne.s32.totalorder %s91, %s93
      %p100 = scmp.eq.s32.totalorder %s20, 1
      %p101 = por %p99, %p100
      %p102 = scmp.ne.s32.totalorder %s93, %s94
      %p103 = scmp.eq.s32.totalorder %s20, 0
      %p104 = por %p102, %p103
      %p105 = scmp.ne.s32.totalorder %s93, %s94
      %p106 = scmp.eq.s32.totalorder %s21, 1
      %p107 = por %p105, %p106
      %p109 = scmp.ne.s32.totalorder %s94, %s108
      %p110 = scmp.eq.s32.totalorder %s21, 0
      %p111 = por %p109, %p110
      %s113 = sadd.s32 %s112, 1
      %p116 = scmp.eq.s32.totalorder %s15, 1
      %p117 = scmp.ne.s32.totalorder %s112, %s114
      %p118 = scmp.eq.s32.totalorder %s15, 0
      %p119 = por %p117, %p118
      %p120 = scmp.ne.s32.totalorder %s112, %s114
      %p121 = scmp.eq.s32.totalorder %s20, 1
      %p122 = por %p120, %p121
      %p123 = scmp.ne.s32.totalorder %s114, %s115
      %p124 = scmp.eq.s32.totalorder %s20, 0
      %p125 = por %p123, %p124
      %p126 = scmp.ne.s32.totalorder %s114, %s115
      %p127 = scmp.eq.s32.totalorder %s21, 1
      %p128 = por %p126, %p127
      %p130 = scmp.ne.s32.totalorder %s115, %s129
      %p131 = scmp.eq.s32.totalorder %s21, 0
      %p132 = por %p130, %p131
      %s133 = ssub.s32 %s15, %s22
      %p134 = scmp.eq.s32.totalorder %s133, 0
      %s136 = sadd.s32 %s135, 1
      %s137 = scalar_select %p134, %s135, %s136
      %p140 = pneg %p134
      %p141 = scmp.eq.s32.totalorder %s15, 1
      %p142 = por %p140, %p141
      %p143 = scmp.ne.s32.totalorder %s135, %s138
      %p144 = scmp.eq.s32.totalorder %s15, 0
      %p145 = por %p143, %p144
      %p146 = scmp.ne.s32.totalorder %s135, %s138
      %p147 = scmp.eq.s32.totalorder %s20, 1
      %p148 = por %p146, %p147
      %p149 = scmp.ne.s32.totalorder %s138, %s139
      %p150 = scmp.eq.s32.totalorder %s20, 0
      %p151 = por %p149, %p150
      %p152 = scmp.ne.s32.totalorder %s138, %s139
      %p153 = scmp.eq.s32.totalorder %s21, 1
      %p154 = por %p152, %p153
      %p156 = scmp.ne.s32.totalorder %s139, %s155
      %p157 = scmp.eq.s32.totalorder %s21, 0
      %p158 = por %p156, %p157
      %p159 = scmp.le.s32.totalorder 1, %s15
      %p160 = scmp.lt.s32.totalorder %s15, 3
      %p161 = pnand %p159, %p160
      %p162 = pneg %p161
      // Predicated region
      $region9: #{tpu_custom_call.1} parent=5 // pred_check
        _
      $region10: #{tpu_custom_call.1} parent=5 // pred_check_branch
        %164 = sbr.rel (%p161) target = $region12
      $region11: #{tpu_custom_call.1} parent=5 // pred_region
        %s165 = ssub.s32 %s15, 1
        // Predicated region
        $region13: #{tpu_custom_call.1} parent=11 // pred_check
          %p166 = pneg %p62
        $region14: #{tpu_custom_call.1} parent=11 // pred_check_branch
          %168 = sbr.rel (%p166) target = $region16
        $region15: #{tpu_custom_call.1} parent=11 // pred_region
          _
        $region16: #{tpu_custom_call.1} parent=11 // pred_fallthru
          _
        // Predicated region
        $region17: #{tpu_custom_call.1} parent=11 // pred_check
          %p169 = pneg %p83
        $region18: #{tpu_custom_call.1} parent=11 // pred_check_branch
          %171 = sbr.rel (%p169) target = $region20
        $region19: #{tpu_custom_call.1} parent=11 // pred_region
          _
        $region20: #{tpu_custom_call.1} parent=11 // pred_fallthru
          _
        // Predicated region
        $region21: #{tpu_custom_call.1} parent=11 // pred_check
          %p172 = pneg %p104
        $region22: #{tpu_custom_call.1} parent=11 // pred_check_branch
          %174 = sbr.rel (%p172) target = $region24
        $region23: #{tpu_custom_call.1} parent=11 // pred_region
          %176 = vsyncadd [#allocation3], 0
          %s178 = sshll.u32 %s3, 4
          %s179 = int_to_ptr.hbm [resolvable:$true] %s178
          %s180 = sshll.u32 [#allocation2], 4
          %s181 = int_to_ptr.vmem [resolvable:$true] %s180
          %183 = dma.hbm_to_vmem [thread:$0]  %s179, 128, %s181, [#allocation3]
        $region24: #{tpu_custom_call.1} parent=11 // pred_fallthru
          _
        // Predicated region
        $region25: #{tpu_custom_call.1} parent=11 // pred_check
          %p184 = pneg %p125
        $region26: #{tpu_custom_call.1} parent=11 // pred_check_branch
          %186 = sbr.rel (%p184) target = $region28
        $region27: #{tpu_custom_call.1} parent=11 // pred_region
          _
        $region28: #{tpu_custom_call.1} parent=11 // pred_fallthru
          _
      $region12: #{tpu_custom_call.1} parent=5 // pred_fallthru
        _
      %p187 = scmp.lt.s32.totalorder %s15, 2
      // Predicated region
      $region29: #{tpu_custom_call.1} parent=5 // pred_check
        %p188 = pneg %p187
      $region30: #{tpu_custom_call.1} parent=5 // pred_check_branch
        %190 = sbr.rel (%p188) target = $region32
      $region31: #{tpu_custom_call.1} parent=5 // pred_region
        // Predicated region
        $region33: #{tpu_custom_call.1} parent=31 // pred_check
          %p191 = pneg %p35
        $region34: #{tpu_custom_call.1} parent=31 // pred_check_branch
          %193 = sbr.rel (%p191) target = $region36
        $region35: #{tpu_custom_call.1} parent=31 // pred_region
          %p194 = scmp.lt.s32.totalorder %s15, 1
          %s195 = scalar_select %p194, %s15, 1
          %s196 = smul.addr %s195, 2
          %s197 = smul.addr %s196, 8
          %s198 = scalar_lea.vmem %s0, %s197
        $region36: #{tpu_custom_call.1} parent=31 // pred_fallthru
          _
      $region32: #{tpu_custom_call.1} parent=5 // pred_fallthru
        _
      %p199 = scmp.le.s32.totalorder 1, %s15
      %p200 = scmp.lt.s32.totalorder %s15, 3
      %p201 = pnand %p199, %p200
      %p202 = pneg %p201
      // Predicated region
      $region37: #{tpu_custom_call.1} parent=5 // pred_check
        _
      $region38: #{tpu_custom_call.1} parent=5 // pred_check_branch
        %204 = sbr.rel (%p201) target = $region40
      $region39: #{tpu_custom_call.1} parent=5 // pred_region
        %s205 = ssub.s32 %s15, 1
        // Predicated region
        $region41: #{tpu_custom_call.1} parent=39 // pred_check
          %p206 = pneg %p104
        $region42: #{tpu_custom_call.1} parent=39 // pred_check_branch
          %208 = sbr.rel (%p206) target = $region44
        $region43: #{tpu_custom_call.1} parent=39 // pred_region
          %210 = dma.done [#allocation3], 128
        $region44: #{tpu_custom_call.1} parent=39 // pred_fallthru
          _
        %p211 = scmp.lt.s32.totalorder %s20, 1
        %s212 = scalar_select %p211, %s20, 1
        %s213 = smul.addr %s212, 2
        %s214 = smul.addr %s213, 8
        %s215 = scalar_lea.vmem %s0, %s214
        %p216 = pneg %p41
        %p217 = pneg %p38
        %p218 = pneg %p62
        %p219 = pneg %p59
        %p220 = pneg %p83
        %p221 = pneg %p80
        %p222 = pneg %p104
        %p223 = pneg %p101
        %p224 = pneg %p125
        %p225 = pneg %p122
        %p226 = pneg %p151
        %p227 = pneg %p148
        %s228 = sand.u32 %s138, 1
        %s229 = scalar_lea.sflag [#allocation4], %s228
        %s230 = sand.u32 %s138, 1
        %s231 = smul.addr %s230, 16
        %s232 = scalar_lea.vmem [#allocation5], %s231
        %p233 = scmp.lt.s32.totalorder %s20, 1
        %s234 = scalar_select %p233, %s20, 1
        %s235 = smul.addr %s234, 2
        %s236 = smul.addr %s235, 8
        %s237 = scalar_lea.vmem %s0, %s236
        %v238 = vld [vmem:[%s237] sm:$0xff]
        %v239 = vld [vmem:[%s237 + $0x8] sm:$0xff]
        %v240 = vld [vmem:[%s1] sm:$0xff]
        %v241 = vld [vmem:[%s1 + $0x8] sm:$0xff]
        %vm242 = vcmask 64512
        %v244 = vsel %vm242, %v240, 0
        %v247 = vsel %vm242, %v241, 0
        %249 = vmatpush.msra.mxu0 0.0
        %250 = vmatpush.msra.mxu0 0.0
        %251 = vmatpush.msra.mxu0 0.0
        %252 = vmatpush.msra.mxu0 0.0
        %253 = vmatpush.msra.mxu0 0.0
        %254 = vmatpush.msra.mxu0 0.0
        %255 = vmatpush.msra.mxu0 0.0
        %256 = vmatpush.msra.mxu0 0.0
        %257 = vmatpush.msra.mxu0 0.0
        %258 = vmatpush.msra.mxu0 0.0
        %259 = vmatpush.msra.mxu0 0.0
        %260 = vmatpush.msra.mxu0 0.0
        %261 = vmatpush.msra.mxu0 0.0
        %262 = vmatpush.msra.mxu0 0.0
        %263 = vmatpush.msra.mxu0 0.0
        %264 = vmatpush.msra.mxu0 %v238
        %265 = vmatmul.f32.gmra.mxu0 %v244
        %v266 = vpop.f32.mrf.mxu0
        %v267 = vadd.f32 0.0, %v266
        %268 = vmatmul.f32.gmra.mxu0 %v247
        %v269 = vpop.f32.mrf.mxu0
        %v270 = vadd.f32 0.0, %v269
        %271 = vdwg.mxu0
        %272 = vmatpush.msra.mxu0 0.0
        %273 = vmatpush.msra.mxu0 0.0
        %274 = vmatpush.msra.mxu0 0.0
        %275 = vmatpush.msra.mxu0 0.0
        %276 = vmatpush.msra.mxu0 0.0
        %277 = vmatpush.msra.mxu0 0.0
        %278 = vmatpush.msra.mxu0 0.0
        %279 = vmatpush.msra.mxu0 0.0
        %280 = vmatpush.msra.mxu0 0.0
        %281 = vmatpush.msra.mxu0 0.0
        %282 = vmatpush.msra.mxu0 0.0
        %283 = vmatpush.msra.mxu0 0.0
        %284 = vmatpush.msra.mxu0 0.0
        %285 = vmatpush.msra.mxu0 0.0
        %286 = vmatpush.msra.mxu0 0.0
        %287 = vmatpush.msra.mxu0 %v239
        %288 = vmatmul.f32.gmra.mxu0 %v244
        %v289 = vpop.f32.mrf.mxu0
        %v290 = vadd.f32 0.0, %v289
        %291 = vmatmul.f32.gmra.mxu0 %v247
        %v292 = vpop.f32.mrf.mxu0
        %v293 = vadd.f32 0.0, %v292
        %294 = vdwg.mxu0
        %v295 = vmax.f32 %v267, %v290
        %296 = vmax.xlane.f32.xlu0 %v295
        %v297 = vpop.xlane.xlu0 %296
        %v298 = vsub.f32 %v267, %v297
        %v299 = vsub.f32 %v290, %v297
        %v300 = vmul.f32 %v298, 1.442695
        %v301 = vpow.pop %v300
        %v302 = vmul.f32 %v299, 1.442695
        %v303 = vpow.pop %v302
        %v304 = vadd.f32 %v301, %v303
        %305 = vadd.xlane.f32.xlu0 %v304
        %v306 = vpop.xlane.xlu0 %305
        %v307 = vmul.f32 %v301, %v270
        %v308 = vmul.f32 %v303, %v293
        %v309 = vadd.f32 %v307, %v308
        %310 = vadd.xlane.f32.xlu0 %v309
        %v311 = vpop.xlane.xlu0 %310
        %v312 = vrcp.pop %v306
        %v313 = vmul.f32 %v306, %v312
        %v314 = vsub.f32 1.0, %v313
        %v315 = vmul.f32 %v312, %v314
        %v316 = vadd.f32 %v312, %v315
        %vm317 = vweird.f32 %v306
        %vm318 = vweird.f32 %v312
        %vm319 = vmor %vm317, %vm318
        %v320 = vsel %vm319, %v312, %v316
        %v321 = vand.u32 2147483647, %v306
        %vm322 = vcmp.eq.f32.partialorder %v321, 8.507059e+37
        %v323 = vand.u32 %v306, 2147483648
        %v324 = vor.u32 1.1754944e-38, %v323
        %v325 = vsel %vm322, %v324, %v320
        %v326 = vmul.f32 %v311, %v325
        %v327 = vld [vmem:[%s2] sm:$0xff]
        %v328 = vadd.f32 %v326, %v327
        %v329 = vld [vmem:[#allocation2] sm:$0xff]
        %v330 = vld [vmem:[%s4] sm:$0xff]
        %v332 = vsel %vm242, %v329, 0
        %334 = vmatpush.msra.mxu0 0.0
        %335 = vmatpush.msra.mxu0 0.0
        %336 = vmatpush.msra.mxu0 0.0
        %337 = vmatpush.msra.mxu0 0.0
        %338 = vmatpush.msra.mxu0 0.0
        %339 = vmatpush.msra.mxu0 0.0
        %340 = vmatpush.msra.mxu0 0.0
        %341 = vmatpush.msra.mxu0 0.0
        %342 = vmatpush.msra.mxu0 0.0
        %343 = vmatpush.msra.mxu0 0.0
        %344 = vmatpush.msra.mxu0 0.0
        %345 = vmatpush.msra.mxu0 0.0
        %346 = vmatpush.msra.mxu0 0.0
        %347 = vmatpush.msra.mxu0 0.0
        %348 = vmatpush.msra.mxu0 0.0
        %349 = vmatpush.msra.mxu0 %v328
        %350 = vmatmul.f32.gmra.mxu0 %v332
        %v351 = vpop.f32.mrf.mxu0
        %v352 = vadd.f32 %v330, %v351
        %353 = vdwg.mxu0
        %355 = vset.pattern.permute.xlu0 0
        %356 = vperm.xlu0 %355, %v352
        %v357 = vpop.permute.xlu0 %356
        %v359 = vadd.f32 %v238, %v357
        %v360 = vadd.f32 %v239, %v357
        %361 = vst [vmem:[%s232] sm:$0xff] %v359
        %362 = vst [vmem:[%s232 + $0x8] sm:$0xff] %v360
        %s363 = sand.u32 %s138, 1
        %s364 = scalar_lea.sflag [#allocation4], %s363
        %s365 = sand.u32 %s138, 1
        %s366 = smul.addr %s365, 16
        %s367 = scalar_lea.vmem [#allocation5], %s366
        // Predicated region
        $region45: #{tpu_custom_call.1} parent=39 // pred_check
          %p368 = pneg %p148
        $region46: #{tpu_custom_call.1} parent=39 // pred_check_branch
          %370 = sbr.rel (%p368) target = $region48
        $region47: #{tpu_custom_call.1} parent=39 // pred_region
          %372 = vsyncadd %s364, 0
          %s373 = smul.addr %s20, 2
          %s374 = smul.addr %s373, 8
          %s375 = scalar_lea.hbm %s5, %s374
          %s377 = sshll.u32 %s367, 4
          %s378 = int_to_ptr.vmem [resolvable:$true] %s377
          %s379 = sshll.u32 %s375, 4
          %s380 = int_to_ptr.hbm [resolvable:$true] %s379
          %382 = dma.vmem_to_hbm [thread:$0]  %s378, 256, %s380, %s364
        $region48: #{tpu_custom_call.1} parent=39 // pred_fallthru
          _
      $region40: #{tpu_custom_call.1} parent=5 // pred_fallthru
        _
      %p383 = scmp.le.s32.totalorder 2, %s15
      // Predicated region
      $region49: #{tpu_custom_call.1} parent=5 // pred_check
        %p384 = pneg %p383
      $region50: #{tpu_custom_call.1} parent=5 // pred_check_branch
        %386 = sbr.rel (%p384) target = $region52
      $region51: #{tpu_custom_call.1} parent=5 // pred_region
        %s387 = ssub.s32 %s15, 2
        // Predicated region
        $region53: #{tpu_custom_call.1} parent=51 // pred_check
          %p388 = pneg %p154
        $region54: #{tpu_custom_call.1} parent=51 // pred_check_branch
          %390 = sbr.rel (%p388) target = $region56
        $region55: #{tpu_custom_call.1} parent=51 // pred_region
          %s391 = sand.u32 %s139, 1
          %s392 = scalar_lea.sflag [#allocation4], %s391
          %s393 = sand.u32 %s139, 1
          %s394 = smul.addr %s393, 16
          %s395 = scalar_lea.vmem [#allocation5], %s394
          %397 = dma.done %s392, 256
        $region56: #{tpu_custom_call.1} parent=51 // pred_fallthru
          _
      $region52: #{tpu_custom_call.1} parent=5 // pred_fallthru
        _
    $region6: #{tpu_custom_call.1} parent=1 // loop_footer
      %s19 = sadd.s32 1, %s15
    $region7: #{tpu_custom_call.1} parent=1 // loop_footer_branch
      %14 = sbr.rel target = $region3
    $region8: #{tpu_custom_call.1} parent=1 // loop_exit
      _
    %398 = vsyncpa [#allocation3], 1
    %s399 = scalar_lea.sflag [#allocation3], 1
    %400 = vsyncpa %s399, 1
    %401 = vsyncpa [#allocation4], 1
    %s402 = scalar_lea.sflag [#allocation4], 1
    %403 = vsyncpa %s402, 1

</llo_original>
